<compile_context>
chip_gen: v6e
topology: v6e:2x2x1
jax: 0.10.0
libtpu: 0.0.40
codegen_flags: <defaults>
</compile_context>

<pallas_src>
import functools

import jax
import jax.numpy as jnp
from jax import lax
from jax.experimental import pallas as pl
from jax.experimental.pallas import tpu as pltpu

LOG_STD_MIN = -10.0
LOG_STD_MAX = 2.0
# log_std = MIN + 0.5*(MAX-MIN)*(tanh(x)+1)  ==  tanh(x)*_LS_SCALE + _LS_SHIFT
_LS_SCALE = 0.5 * (LOG_STD_MAX - LOG_STD_MIN)   # 6.0
_LS_SHIFT = 0.5 * (LOG_STD_MAX + LOG_STD_MIN)   # -4.0


def _round_up(x, m):
    return (x + m - 1) // m * m


# --------------------------------------------------------------------------- #
# Kernel
# --------------------------------------------------------------------------- #
def _actor_kernel(obs_ref, w1_ref, b1_ref, w2_ref, b2_ref, w3_ref, b3_ref,
                  out_ref, *, action_dim):
    # Trunk MLP: Linear -> ReLU -> Linear -> ReLU -> Linear.
    # Obs arrives f32; cast to bf16 on the VPU (free under MXU slack) so HBM
    # only ever sees one f32 read of obs.  bf16 MXU operands, f32 accumulation.
    x = obs_ref[...].astype(w1_ref.dtype)
    h = jnp.dot(x, w1_ref[...], preferred_element_type=jnp.float32) + b1_ref[...]
    h = jnp.maximum(h, 0.0)
    h = jnp.dot(h.astype(w2_ref.dtype), w2_ref[...],
                preferred_element_type=jnp.float32) + b2_ref[...]
    h = jnp.maximum(h, 0.0)
    out = jnp.dot(h.astype(w3_ref.dtype), w3_ref[...],
                  preferred_element_type=jnp.float32) + b3_ref[...]

    # Lanes [0, A) = mu, lanes [A, 2A) = log_std, remaining lanes = zero pad.
    # Apply tanh-squash + exp only on the log_std lanes via a lane mask — no
    # cross-lane slice/relayout, single lane-dense store.  tanh/exp run on the
    # otherwise-idle EUP slot; extra (pad) lanes are free filler.
    lane = lax.broadcasted_iota(jnp.int32, out.shape, dimension=1)
    is_log_std = jnp.logical_and(lane >= action_dim, lane < 2 * action_dim)
    std = jnp.exp(jnp.tanh(out) * _LS_SCALE + _LS_SHIFT)
    out_ref[...] = jnp.where(is_log_std, std, out).astype(out_ref.dtype)


# --------------------------------------------------------------------------- #
# One-time parameter preparation (hoisted out of the per-call path)
# --------------------------------------------------------------------------- #
def prepare_actor_params(params, action_dim):
    """Pad + cast the trunk parameters once.

    - output columns padded to a lane-dense multiple of 128 (mu | log_std | 0)
    - hidden optionally padded to a multiple of 256 (full 2x256x256 MXU passes
      on v6e/v7x); exact, since padded hidden units are 0 through ReLU and the
      padded w2/w3 rows are 0.
    - weights -> bf16 MXU operands, biases -> f32.
    """
    w1, b1, w2, b2, w3, b3 = params
    obs_dim, hidden = w1.shape
    hidden_p = hidden if hidden <= 128 else _round_up(hidden, 256)
    out_pad = _round_up(max(2 * action_dim, 128), 128)

    bf16, f32 = jnp.bfloat16, jnp.float32
    w1p = jnp.zeros((obs_dim, hidden_p), bf16).at[:, :hidden].set(w1.astype(bf16))
    b1p = jnp.zeros((1, hidden_p), f32).at[:, :hidden].set(
        b1.reshape(1, -1).astype(f32))
    w2p = jnp.zeros((hidden_p, hidden_p), bf16).at[:hidden, :hidden].set(
        w2.astype(bf16))
    b2p = jnp.zeros((1, hidden_p), f32).at[:, :hidden].set(
        b2.reshape(1, -1).astype(f32))
    w3p = jnp.zeros((hidden_p, out_pad), bf16).at[:hidden, :2 * action_dim].set(
        w3.astype(bf16))
    b3p = jnp.zeros((1, out_pad), f32).at[:, :2 * action_dim].set(
        b3.reshape(1, -1).astype(f32))
    return (w1p, b1p, w2p, b2p, w3p, b3p)


# --------------------------------------------------------------------------- #
# Tile-size / VMEM heuristics
# --------------------------------------------------------------------------- #
def _vmem_need_bytes(tb, obs_dim, hidden, out_pad, out_bytes):
    # single-buffered weights/biases
    weights = (obs_dim * hidden + hidden * hidden + hidden * out_pad) * 2
    weights += (2 * hidden + out_pad) * 4
    # double-buffered obs/out tiles
    io = 2 * tb * obs_dim * 4 + 2 * tb * out_pad * out_bytes
    # in-kernel intermediates: f32 h + bf16 cast per stage, f32 out tile
    interm = 2 * tb * hidden * (4 + 2) + tb * out_pad * 4
    return weights + io + interm


def _choose_batch_tile(batch, obs_dim, hidden, out_pad, out_bytes, block_b,
                       vmem_budget):
    if batch < 16:
        # Single tiny tile; block == full batch dim is always layout-legal.
        return batch
    # Aim for >=2 grid steps so the "parallel" axis can shard across v7x's two
    # TensorCores (v5e/v6e have one TC: extra steps just amortize normally).
    half = _round_up(pl.cdiv(batch, 2), 8)
    tb = min(block_b, half, _round_up(batch, 8))
    if tb >= 256:
        tb = (tb // 256) * 256  # full-M MXU passes on v6e/v7x
    # Cap so the live working set fits VMEM (v7x: 64 MiB/TC vs 128 on v5e/v6e).
    while tb > 256 and _vmem_need_bytes(tb, obs_dim, hidden, out_pad,
                                        out_bytes) > vmem_budget:
        tb -= 256
    return max(tb, 8)


# --------------------------------------------------------------------------- #
# Forward wrapper
# --------------------------------------------------------------------------- #
def diag_gaussian_actor_forward(obs, prepared_params, action_dim, *,
                                block_b=1024):
    """Fused DiagGaussianActor trunk. Returns (mu, std) of the SquashedNormal.

    `prepared_params` must come from prepare_actor_params() (one-time prep).
    """
    w1p, b1p, w2p, b2p, w3p, b3p = prepared_params
    batch, obs_dim = obs.shape
    assert obs_dim == w1p.shape[0]
    hidden_p = w1p.shape[1]
    out_pad = w3p.shape[1]

    out_dtype = jnp.bfloat16           # halves padded writeback; mu/std upcast below
    out_bytes = 2

    try:
        vmem_cap = int(pltpu.get_tpu_info().vmem_capacity_bytes)
    except Exception:
        vmem_cap = 64 * 1024 * 1024    # safe lower bound (v7x per-TC VMEM)

    tb = _choose_batch_tile(batch, obs_dim, hidden_p, out_pad, out_bytes,
                            block_b, int(0.75 * vmem_cap))
    grid = (pl.cdiv(batch, tb),)

    need = _vmem_need_bytes(tb, obs_dim, hidden_p, out_pad, out_bytes)
    vmem_limit = int(min(0.9 * vmem_cap,
                         max(32 * 1024 * 1024, 1.25 * need + 8 * 1024 * 1024)))

    rows = grid[0] * tb
    flops = 2 * rows * (obs_dim * hidden_p + hidden_p * hidden_p
                        + hidden_p * out_pad)
    transcendentals = 2 * rows * out_pad          # tanh + exp per output element
    bytes_accessed = (rows * obs_dim * 4
                      + (obs_dim * hidden_p + hidden_p * hidden_p
                         + hidden_p * out_pad) * 2
                      + (2 * hidden_p + out_pad) * 4
                      + rows * out_pad * out_bytes)

    const = lambda i: (0, 0)

    def _run(single_buffer_weights):
        # Weights/biases never change block index -> one VMEM buffer suffices
        # (halves resident weight footprint; matters most on v7x's 64 MiB).
        wkw = ({"pipeline_mode": pl.Buffered(1)}
               if single_buffer_weights else {})
        in_specs = [
            pl.BlockSpec((tb, obs_dim), lambda i: (i, 0)),       # obs (pipelined)
            pl.BlockSpec((obs_dim, hidden_p), const, **wkw),     # w1 (resident)
            pl.BlockSpec((1, hidden_p), const, **wkw),           # b1
            pl.BlockSpec((hidden_p, hidden_p), const, **wkw),    # w2
            pl.BlockSpec((1, hidden_p), const, **wkw),           # b2
            pl.BlockSpec((hidden_p, out_pad), const, **wkw),     # w3 (padded)
            pl.BlockSpec((1, out_pad), const, **wkw),            # b3 (padded)
        ]
        return pl.pallas_call(
            functools.partial(_actor_kernel, action_dim=action_dim),
            grid=grid,
            in_specs=in_specs,
            out_specs=pl.BlockSpec((tb, out_pad), lambda i: (i, 0)),
            out_shape=jax.ShapeDtypeStruct((batch, out_pad), out_dtype),
            compiler_params=pltpu.CompilerParams(
                dimension_semantics=("parallel",),
                vmem_limit_bytes=vmem_limit,
            ),
            cost_estimate=pl.CostEstimate(
                flops=flops,
                transcendentals=transcendentals,
                bytes_accessed=bytes_accessed,
            ),
        )(obs, w1p, b1p, w2p, b2p, w3p, b3p)

    try:
        out = _run(True)
    except Exception:
        # Fallback for JAX builds without BlockSpec(pipeline_mode=...) support.
        out = _run(False)

    mu = out[:, :action_dim].astype(jnp.float32)
    std = out[:, action_dim:2 * action_dim].astype(jnp.float32)
    return mu, std


# --------------------------------------------------------------------------- #
# Test / reference
# --------------------------------------------------------------------------- #
def init_params(key, obs_dim, action_dim, hidden_dim):
    """Deterministic synthetic init (roughly matching utils.weight_init scale)."""
    k1, k2, k3 = jax.random.split(key, 3)
    w1 = jax.random.normal(k1, (obs_dim, hidden_dim), jnp.float32) / jnp.sqrt(obs_dim)
    b1 = jnp.zeros((1, hidden_dim), jnp.float32)
    w2 = jax.random.normal(k2, (hidden_dim, hidden_dim), jnp.float32) / jnp.sqrt(hidden_dim)
    b2 = jnp.zeros((1, hidden_dim), jnp.float32)
    w3 = jax.random.normal(k3, (hidden_dim, 2 * action_dim), jnp.float32) / jnp.sqrt(hidden_dim)
    b3 = jnp.zeros((1, 2 * action_dim), jnp.float32)
    return (w1, b1, w2, b2, w3, b3)


def _reference_forward(obs, params, action_dim):
    """Pure-JAX reference (same bf16 operand / f32 accumulation recipe)."""
    w1, b1, w2, b2, w3, b3 = params
    bf = jnp.bfloat16
    h = jnp.maximum(jnp.dot(obs.astype(bf), w1.astype(bf),
                            preferred_element_type=jnp.float32) + b1, 0.0)
    h = jnp.maximum(jnp.dot(h.astype(bf), w2.astype(bf),
                            preferred_element_type=jnp.float32) + b2, 0.0)
    out = jnp.dot(h.astype(bf), w3.astype(bf),
                  preferred_element_type=jnp.float32) + b3
    mu, log_std = out[:, :action_dim], out[:, action_dim:]
    log_std = jnp.tanh(log_std)
    log_std = LOG_STD_MIN + 0.5 * (LOG_STD_MAX - LOG_STD_MIN) * (log_std + 1.0)
    return mu, jnp.exp(log_std)


if __name__ == "__main__":
    # Small shapes consistent with the module (hidden_depth=2 MLP trunk).
    batch = 8
    obs_dim = 32
    action_dim = 4
    hidden_dim = 32

    key = jax.random.PRNGKey(0)
    k_obs, k_params = jax.random.split(key)
    obs = jax.random.normal(k_obs, (batch, obs_dim), jnp.float32)
    params = init_params(k_params, obs_dim, action_dim, hidden_dim)

    prepared = prepare_actor_params(params, action_dim)   # one-time prep
    mu, std = diag_gaussian_actor_forward(obs, prepared, action_dim)
    jax.block_until_ready((mu, std))

    mu_ref, std_ref = _reference_forward(obs, params, action_dim)
    assert mu.shape == (batch, action_dim) and std.shape == (batch, action_dim)
    assert jnp.allclose(mu, mu_ref, atol=2e-2, rtol=2e-2)
    assert jnp.allclose(std, std_ref, atol=2e-2, rtol=2e-2)
    assert bool(jnp.all(std > 0.0))

    print("KERNEL_OK")
</pallas_src>

<mosaic_0001>
module attributes {stable_mosaic.version = 11 : i64} {
  func.func @_actor_kernel(%arg0: i32, %arg1: memref<8x32xf32, #tpu.memory_space<vmem>>, %arg2: memref<32x32xbf16, #tpu.memory_space<vmem>>, %arg3: memref<1x32xf32, #tpu.memory_space<vmem>>, %arg4: memref<32x32xbf16, #tpu.memory_space<vmem>>, %arg5: memref<1x32xf32, #tpu.memory_space<vmem>>, %arg6: memref<32x128xbf16, #tpu.memory_space<vmem>>, %arg7: memref<1x128xf32, #tpu.memory_space<vmem>>, %arg8: memref<8x128xbf16, #tpu.memory_space<vmem>>) attributes {dimension_semantics = [#tpu.dimension_semantics<parallel>], iteration_bounds = array<i64: 1>, scalar_prefetch = 0 : i64, scratch_operands = 0 : i64, tpu.core_type = #tpu.core_type<tc>, window_params = [{transform_indices = @transform_0, window_bounds = array<i64: 8, 32>}, {pipeline_mode = #tpu.pipeline_mode<synchronous>, transform_indices = @transform_1, window_bounds = array<i64: 32, 32>}, {pipeline_mode = #tpu.pipeline_mode<synchronous>, transform_indices = @transform_2, window_bounds = array<i64: 1, 32>}, {pipeline_mode = #tpu.pipeline_mode<synchronous>, transform_indices = @transform_3, window_bounds = array<i64: 32, 32>}, {pipeline_mode = #tpu.pipeline_mode<synchronous>, transform_indices = @transform_4, window_bounds = array<i64: 1, 32>}, {pipeline_mode = #tpu.pipeline_mode<synchronous>, transform_indices = @transform_5, window_bounds = array<i64: 32, 128>}, {pipeline_mode = #tpu.pipeline_mode<synchronous>, transform_indices = @transform_6, window_bounds = array<i64: 1, 128>}, {transform_indices = @transform_7, window_bounds = array<i64: 8, 128>}]} {
    %c0 = arith.constant 0 : index
    %c0_0 = arith.constant 0 : index
    %0 = vector.load %arg1[%c0, %c0_0] : memref<8x32xf32, #tpu.memory_space<vmem>>, vector<8x32xf32>
    %1 = arith.truncf %0 : vector<8x32xf32> to vector<8x32xbf16>
    %c0_1 = arith.constant 0 : index
    %c0_2 = arith.constant 0 : index
    %2 = vector.load %arg2[%c0_1, %c0_2] : memref<32x32xbf16, #tpu.memory_space<vmem>>, vector<32x32xbf16>
    %cst = arith.constant dense<0.000000e+00> : vector<8x32xf32>
    %3 = tpu.matmul %1, %2, %cst {dimension_numbers = #tpu.dot_dimension_numbers<[1], [0], [0], [1], [0, 0, 1, 1], [], []>} : vector<8x32xbf16>, vector<32x32xbf16>, vector<8x32xf32> -> vector<8x32xf32>
    %c0_3 = arith.constant 0 : index
    %c0_4 = arith.constant 0 : index
    %4 = vector.load %arg3[%c0_3, %c0_4] : memref<1x32xf32, #tpu.memory_space<vmem>>, vector<1x32xf32>
    %5 = vector.broadcast %4 : vector<1x32xf32> to vector<8x32xf32>
    %6 = arith.addf %3, %5 : vector<8x32xf32>
    %cst_5 = arith.constant 0.000000e+00 : f32
    %7 = vector.broadcast %cst_5 : f32 to vector<8x32xf32>
    %8 = arith.maximumf %6, %7 : vector<8x32xf32>
    %9 = arith.truncf %8 : vector<8x32xf32> to vector<8x32xbf16>
    %c0_6 = arith.constant 0 : index
    %c0_7 = arith.constant 0 : index
    %10 = vector.load %arg4[%c0_6, %c0_7] : memref<32x32xbf16, #tpu.memory_space<vmem>>, vector<32x32xbf16>
    %cst_8 = arith.constant dense<0.000000e+00> : vector<8x32xf32>
    %11 = tpu.matmul %9, %10, %cst_8 {dimension_numbers = #tpu.dot_dimension_numbers<[1], [0], [0], [1], [0, 0, 1, 1], [], []>} : vector<8x32xbf16>, vector<32x32xbf16>, vector<8x32xf32> -> vector<8x32xf32>
    %c0_9 = arith.constant 0 : index
    %c0_10 = arith.constant 0 : index
    %12 = vector.load %arg5[%c0_9, %c0_10] : memref<1x32xf32, #tpu.memory_space<vmem>>, vector<1x32xf32>
    %13 = vector.broadcast %12 : vector<1x32xf32> to vector<8x32xf32>
    %14 = arith.addf %11, %13 : vector<8x32xf32>
    %cst_11 = arith.constant 0.000000e+00 : f32
    %15 = vector.broadcast %cst_11 : f32 to vector<8x32xf32>
    %16 = arith.maximumf %14, %15 : vector<8x32xf32>
    %17 = arith.truncf %16 : vector<8x32xf32> to vector<8x32xbf16>
    %c0_12 = arith.constant 0 : index
    %c0_13 = arith.constant 0 : index
    %18 = vector.load %arg6[%c0_12, %c0_13] : memref<32x128xbf16, #tpu.memory_space<vmem>>, vector<32x128xbf16>
    %cst_14 = arith.constant dense<0.000000e+00> : vector<8x128xf32>
    %19 = tpu.matmul %17, %18, %cst_14 {dimension_numbers = #tpu.dot_dimension_numbers<[1], [0], [0], [1], [0, 0, 1, 1], [], []>} : vector<8x32xbf16>, vector<32x128xbf16>, vector<8x128xf32> -> vector<8x128xf32>
    %c0_15 = arith.constant 0 : index
    %c0_16 = arith.constant 0 : index
    %20 = vector.load %arg7[%c0_15, %c0_16] : memref<1x128xf32, #tpu.memory_space<vmem>>, vector<1x128xf32>
    %21 = vector.broadcast %20 : vector<1x128xf32> to vector<8x128xf32>
    %22 = arith.addf %19, %21 : vector<8x128xf32>
    %23 = tpu.iota {dimensions = array<i32: 1>} : vector<8x128xi32>
    %c4_i32 = arith.constant 4 : i32
    %24 = vector.broadcast %c4_i32 : i32 to vector<8x128xi32>
    %25 = arith.cmpi sge, %23, %24 : vector<8x128xi32>
    %c8_i32 = arith.constant 8 : i32
    %26 = vector.broadcast %c8_i32 : i32 to vector<8x128xi32>
    %27 = arith.cmpi slt, %23, %26 : vector<8x128xi32>
    %28 = arith.andi %25, %27 : vector<8x128xi1>
    %29 = math.tanh %22 : vector<8x128xf32>
    %cst_17 = arith.constant 6.000000e+00 : f32
    %30 = vector.broadcast %cst_17 : f32 to vector<8x128xf32>
    %31 = arith.mulf %29, %30 : vector<8x128xf32>
    %cst_18 = arith.constant -4.000000e+00 : f32
    %32 = vector.broadcast %cst_18 : f32 to vector<8x128xf32>
    %33 = arith.addf %31, %32 : vector<8x128xf32>
    %34 = math.exp %33 : vector<8x128xf32>
    %35 = arith.select %28, %34, %22 : vector<8x128xi1>, vector<8x128xf32>
    %36 = arith.truncf %35 : vector<8x128xf32> to vector<8x128xbf16>
    %c0_19 = arith.constant 0 : index
    %c0_20 = arith.constant 0 : index
    %37 = vector.load %arg8[%c0_19, %c0_20] : memref<8x128xbf16, #tpu.memory_space<vmem>>, vector<8x128xbf16>
    tpu.vector_store %arg8[%c0_19, %c0_20], %36 {strides = array<i32>} : memref<8x128xbf16, #tpu.memory_space<vmem>>, vector<8x128xbf16>,
    return
  }
  func.func @transform_0(%arg0: i32) -> (i32, i32) {
    %c0_i32 = arith.constant 0 : i32
    %c0_i32_0 = arith.constant 0 : i32
    return %arg0, %c0_i32 : i32, i32
  }
  func.func @transform_1(%arg0: i32) -> (i32, i32) {
    %c0_i32 = arith.constant 0 : i32
    %c0_i32_0 = arith.constant 0 : i32
    %c0_i32_1 = arith.constant 0 : i32
    return %c0_i32, %c0_i32_0 : i32, i32
  }
  func.func @transform_2(%arg0: i32) -> (i32, i32) {
    %c0_i32 = arith.constant 0 : i32
    %c0_i32_0 = arith.constant 0 : i32
    %c0_i32_1 = arith.constant 0 : i32
    return %c0_i32, %c0_i32_0 : i32, i32
  }
  func.func @transform_3(%arg0: i32) -> (i32, i32) {
    %c0_i32 = arith.constant 0 : i32
    %c0_i32_0 = arith.constant 0 : i32
    %c0_i32_1 = arith.constant 0 : i32
    return %c0_i32, %c0_i32_0 : i32, i32
  }
  func.func @transform_4(%arg0: i32) -> (i32, i32) {
    %c0_i32 = arith.constant 0 : i32
    %c0_i32_0 = arith.constant 0 : i32
    %c0_i32_1 = arith.constant 0 : i32
    return %c0_i32, %c0_i32_0 : i32, i32
  }
  func.func @transform_5(%arg0: i32) -> (i32, i32) {
    %c0_i32 = arith.constant 0 : i32
    %c0_i32_0 = arith.constant 0 : i32
    %c0_i32_1 = arith.constant 0 : i32
    return %c0_i32, %c0_i32_0 : i32, i32
  }
  func.func @transform_6(%arg0: i32) -> (i32, i32) {
    %c0_i32 = arith.constant 0 : i32
    %c0_i32_0 = arith.constant 0 : i32
    %c0_i32_1 = arith.constant 0 : i32
    return %c0_i32, %c0_i32_0 : i32, i32
  }
  func.func @transform_7(%arg0: i32) -> (i32, i32) {
    %c0_i32 = arith.constant 0 : i32
    %c0_i32_0 = arith.constant 0 : i32
    return %arg0, %c0_i32 : i32, i32
  }
}

module attributes {stable_mosaic.version = 11 : i64} {
  func.func @_actor_kernel(%arg0: i32, %arg1: memref<8x32xf32, #tpu.memory_space<vmem>>, %arg2: memref<32x32xbf16, #tpu.memory_space<vmem>>, %arg3: memref<1x32xf32, #tpu.memory_space<vmem>>, %arg4: memref<32x32xbf16, #tpu.memory_space<vmem>>, %arg5: memref<1x32xf32, #tpu.memory_space<vmem>>, %arg6: memref<32x128xbf16, #tpu.memory_space<vmem>>, %arg7: memref<1x128xf32, #tpu.memory_space<vmem>>, %arg8: memref<8x128xbf16, #tpu.memory_space<vmem>>) attributes {dimension_semantics = [#tpu.dimension_semantics<parallel>], iteration_bounds = array<i64: 1>, scalar_prefetch = 0 : i64, scratch_operands = 0 : i64, tpu.core_type = #tpu.core_type<tc>, window_params = [{transform_indices = @transform_0, window_bounds = array<i64: 8, 32>}, {pipeline_mode = #tpu.pipeline_mode<synchronous>, transform_indices = @transform_1, window_bounds = array<i64: 32, 32>}, {pipeline_mode = #tpu.pipeline_mode<synchronous>, transform_indices = @transform_2, window_bounds = array<i64: 1, 32>}, {pipeline_mode = #tpu.pipeline_mode<synchronous>, transform_indices = @transform_3, window_bounds = array<i64: 32, 32>}, {pipeline_mode = #tpu.pipeline_mode<synchronous>, transform_indices = @transform_4, window_bounds = array<i64: 1, 32>}, {pipeline_mode = #tpu.pipeline_mode<synchronous>, transform_indices = @transform_5, window_bounds = array<i64: 32, 128>}, {pipeline_mode = #tpu.pipeline_mode<synchronous>, transform_indices = @transform_6, window_bounds = array<i64: 1, 128>}, {transform_indices = @transform_7, window_bounds = array<i64: 8, 128>}]} {
    %c0 = arith.constant 0 : index
    %c0_0 = arith.constant 0 : index
    %0 = vector.load %arg1[%c0, %c0_0] : memref<8x32xf32, #tpu.memory_space<vmem>>, vector<8x32xf32>
    %1 = arith.truncf %0 : vector<8x32xf32> to vector<8x32xbf16>
    %c0_1 = arith.constant 0 : index
    %c0_2 = arith.constant 0 : index
    %2 = vector.load %arg2[%c0_1, %c0_2] : memref<32x32xbf16, #tpu.memory_space<vmem>>, vector<32x32xbf16>
    %cst = arith.constant dense<0.000000e+00> : vector<8x32xf32>
    %3 = tpu.matmul %1, %2, %cst {dimension_numbers = #tpu.dot_dimension_numbers<[1], [0], [0], [1], [0, 0, 1, 1], [], []>} : vector<8x32xbf16>, vector<32x32xbf16>, vector<8x32xf32> -> vector<8x32xf32>
    %c0_3 = arith.constant 0 : index
    %c0_4 = arith.constant 0 : index
    %4 = vector.load %arg3[%c0_3, %c0_4] : memref<1x32xf32, #tpu.memory_space<vmem>>, vector<1x32xf32>
    %5 = vector.broadcast %4 : vector<1x32xf32> to vector<8x32xf32>
    %6 = arith.addf %3, %5 : vector<8x32xf32>
    %cst_5 = arith.constant 0.000000e+00 : f32
    %7 = vector.broadcast %cst_5 : f32 to vector<8x32xf32>
    %8 = arith.maximumf %6, %7 : vector<8x32xf32>
    %9 = arith.truncf %8 : vector<8x32xf32> to vector<8x32xbf16>
    %c0_6 = arith.constant 0 : index
    %c0_7 = arith.constant 0 : index
    %10 = vector.load %arg4[%c0_6, %c0_7] : memref<32x32xbf16, #tpu.memory_space<vmem>>, vector<32x32xbf16>
    %cst_8 = arith.constant dense<0.000000e+00> : vector<8x32xf32>
    %11 = tpu.matmul %9, %10, %cst_8 {dimension_numbers = #tpu.dot_dimension_numbers<[1], [0], [0], [1], [0, 0, 1, 1], [], []>} : vector<8x32xbf16>, vector<32x32xbf16>, vector<8x32xf32> -> vector<8x32xf32>
    %c0_9 = arith.constant 0 : index
    %c0_10 = arith.constant 0 : index
    %12 = vector.load %arg5[%c0_9, %c0_10] : memref<1x32xf32, #tpu.memory_space<vmem>>, vector<1x32xf32>
    %13 = vector.broadcast %12 : vector<1x32xf32> to vector<8x32xf32>
    %14 = arith.addf %11, %13 : vector<8x32xf32>
    %cst_11 = arith.constant 0.000000e+00 : f32
    %15 = vector.broadcast %cst_11 : f32 to vector<8x32xf32>
    %16 = arith.maximumf %14, %15 : vector<8x32xf32>
    %17 = arith.truncf %16 : vector<8x32xf32> to vector<8x32xbf16>
    %c0_12 = arith.constant 0 : index
    %c0_13 = arith.constant 0 : index
    %18 = vector.load %arg6[%c0_12, %c0_13] : memref<32x128xbf16, #tpu.memory_space<vmem>>, vector<32x128xbf16>
    %cst_14 = arith.constant dense<0.000000e+00> : vector<8x128xf32>
    %19 = tpu.matmul %17, %18, %cst_14 {dimension_numbers = #tpu.dot_dimension_numbers<[1], [0], [0], [1], [0, 0, 1, 1], [], []>} : vector<8x32xbf16>, vector<32x128xbf16>, vector<8x128xf32> -> vector<8x128xf32>
    %c0_15 = arith.constant 0 : index
    %c0_16 = arith.constant 0 : index
    %20 = vector.load %arg7[%c0_15, %c0_16] : memref<1x128xf32, #tpu.memory_space<vmem>>, vector<1x128xf32>
    %21 = vector.broadcast %20 : vector<1x128xf32> to vector<8x128xf32>
    %22 = arith.addf %19, %21 : vector<8x128xf32>
    %23 = tpu.iota {dimensions = array<i32: 1>} : vector<8x128xi32>
    %c4_i32 = arith.constant 4 : i32
    %24 = vector.broadcast %c4_i32 : i32 to vector<8x128xi32>
    %25 = arith.cmpi sge, %23, %24 : vector<8x128xi32>
    %c8_i32 = arith.constant 8 : i32
    %26 = vector.broadcast %c8_i32 : i32 to vector<8x128xi32>
    %27 = arith.cmpi slt, %23, %26 : vector<8x128xi32>
    %28 = arith.andi %25, %27 : vector<8x128xi1>
    %29 = math.tanh %22 : vector<8x128xf32>
    %cst_17 = arith.constant 6.000000e+00 : f32
    %30 = vector.broadcast %cst_17 : f32 to vector<8x128xf32>
    %31 = arith.mulf %29, %30 : vector<8x128xf32>
    %cst_18 = arith.constant -4.000000e+00 : f32
    %32 = vector.broadcast %cst_18 : f32 to vector<8x128xf32>
    %33 = arith.addf %31, %32 : vector<8x128xf32>
    %34 = math.exp %33 : vector<8x128xf32>
    %35 = arith.select %28, %34, %22 : vector<8x128xi1>, vector<8x128xf32>
    %36 = arith.truncf %35 : vector<8x128xf32> to vector<8x128xbf16>
    %c0_19 = arith.constant 0 : index
    %c0_20 = arith.constant 0 : index
    %37 = vector.load %arg8[%c0_19, %c0_20] : memref<8x128xbf16, #tpu.memory_space<vmem>>, vector<8x128xbf16>
    tpu.vector_store %arg8[%c0_19, %c0_20], %36 {strides = array<i32>} : memref<8x128xbf16, #tpu.memory_space<vmem>>, vector<8x128xbf16>,
    return
  }
  func.func @transform_0(%arg0: i32) -> (i32, i32) {
    %c0_i32 = arith.constant 0 : i32
    %c0_i32_0 = arith.constant 0 : i32
    return %arg0, %c0_i32 : i32, i32
  }
  func.func @transform_1(%arg0: i32) -> (i32, i32) {
    %c0_i32 = arith.constant 0 : i32
    %c0_i32_0 = arith.constant 0 : i32
    %c0_i32_1 = arith.constant 0 : i32
    return %c0_i32, %c0_i32_0 : i32, i32
  }
  func.func @transform_2(%arg0: i32) -> (i32, i32) {
    %c0_i32 = arith.constant 0 : i32
    %c0_i32_0 = arith.constant 0 : i32
    %c0_i32_1 = arith.constant 0 : i32
    return %c0_i32, %c0_i32_0 : i32, i32
  }
  func.func @transform_3(%arg0: i32) -> (i32, i32) {
    %c0_i32 = arith.constant 0 : i32
    %c0_i32_0 = arith.constant 0 : i32
    %c0_i32_1 = arith.constant 0 : i32
    return %c0_i32, %c0_i32_0 : i32, i32
  }
  func.func @transform_4(%arg0: i32) -> (i32, i32) {
    %c0_i32 = arith.constant 0 : i32
    %c0_i32_0 = arith.constant 0 : i32
    %c0_i32_1 = arith.constant 0 : i32
    return %c0_i32, %c0_i32_0 : i32, i32
  }
  func.func @transform_5(%arg0: i32) -> (i32, i32) {
    %c0_i32 = arith.constant 0 : i32
    %c0_i32_0 = arith.constant 0 : i32
    %c0_i32_1 = arith.constant 0 : i32
    return %c0_i32, %c0_i32_0 : i32, i32
  }
  func.func @transform_6(%arg0: i32) -> (i32, i32) {
    %c0_i32 = arith.constant 0 : i32
    %c0_i32_0 = arith.constant 0 : i32
    %c0_i32_1 = arith.constant 0 : i32
    return %c0_i32, %c0_i32_0 : i32, i32
  }
  func.func @transform_7(%arg0: i32) -> (i32, i32) {
    %c0_i32 = arith.constant 0 : i32
    %c0_i32_0 = arith.constant 0 : i32
    return %arg0, %c0_i32 : i32, i32
  }
}

</mosaic_0001>

<llo_original>
// kernel: tpu_custom_call.1
$region0: #{tpu_custom_call.1}
  #allocation0 [shape = 'u32[]', space=smem, size = 0x4, offset = 0x4, fixed_abs, tag = 'smem constant byte address 0x4 - core index']
  #allocation1 [shape = 'u32[144,128]{1,0:T(1,128)}', space=vmem, size = 0x12000, scoped, tag = 'internal scratch']
  %s0 = inlined_call_operand.hbm [shape: f32[8,32], index: 0, kind: input, shape index: {}]
  %s1 = inlined_call_operand.hbm [shape: bf16[32,32], index: 1, kind: input, shape index: {}]
  %s2 = inlined_call_operand.vmem [shape: f32[1,32], index: 2, kind: input, shape index: {}]
  %s3 = inlined_call_operand.hbm [shape: bf16[32,32], index: 3, kind: input, shape index: {}]
  %s4 = inlined_call_operand.vmem [shape: f32[1,32], index: 4, kind: input, shape index: {}]
  %s5 = inlined_call_operand.hbm [shape: bf16[32,128], index: 5, kind: input, shape index: {}]
  %s6 = inlined_call_operand.vmem [shape: f32[1,128], index: 6, kind: input, shape index: {}]
  %s7 = inlined_call_operand.hbm [shape: bf16[8,128], index: 7, kind: output, shape index: {}]
  %s8 = sld [smem:[#allocation0]]
  $region54: #{tpu_custom_call.1} parent=0
    _
  %s10 = ssub.s32 1, %s8
  %s11 = scalar_select 0, %s10, %s8
  $region1: #{tpu_custom_call.1} parent=0
    #allocation2 [shape = 'u8[4096]{0}', space=vmem, size = 0x1000, scoped, tag = 'input window, operand 0, single buffered']
    #allocation3 [shape = 's32[1]{0}', space=sflag, size = 0x4, scoped, tag = 'scoped memory for tpu_custom_call.1']
    #allocation4 [shape = 's32[1]{0}', space=sflag, size = 0x4, scoped, tag = 'scoped memory for tpu_custom_call.1']
    #allocation5 [shape = 'u8[8192]{0}', space=vmem, size = 0x2000, scoped, tag = 'input window, operand 1, single buffered']
    #allocation6 [shape = 's32[1]{0}', space=sflag, size = 0x4, scoped, tag = 'scoped memory for tpu_custom_call.1']
    #allocation7 [shape = 'u8[8192]{0}', space=vmem, size = 0x2000, scoped, tag = 'input window, operand 3, single buffered']
    #allocation8 [shape = 'u8[8192]{0}', space=vmem, size = 0x2000, scoped, tag = 'input window, operand 5, single buffered']
    #allocation9 [shape = 's32[1]{0}', space=sflag, size = 0x4, scoped, tag = 'scoped memory for tpu_custom_call.1']
    #allocation10 [shape = 'u8[2048]{0}', space=vmem, size = 0x800, scoped, tag = 'output window, operand 0, single buffered']
    %12 = vsyncpa [#allocation3], 0
    %13 = vsyncpa [#allocation6], 0
    %14 = vsyncpa [#allocation9], 0
    %15 = vsyncpa [#allocation4], 0
    // Predicated region
    $region2: #{tpu_custom_call.1} parent=1 // pred_check
      _
    $region3: #{tpu_custom_call.1} parent=1 // pred_check_branch
      %17 = sbr.rel (0) target = $region5
    $region4: #{tpu_custom_call.1} parent=1 // pred_region
      %s19 = ssub.s32 128, 128
      %20 = vsyncadd [#allocation3], %s19
      %s22 = sshll.u32 [#allocation2], 4
      %s23 = int_to_ptr.vmem [resolvable:$true] %s22
      %25 = dma.hbm_to_vmem [thread:$0]  %s0, 128, %s23, [#allocation3]
    $region5: #{tpu_custom_call.1} parent=1 // pred_fallthru
      _
    // Predicated region
    $region6: #{tpu_custom_call.1} parent=1 // pred_check
      _
    $region7: #{tpu_custom_call.1} parent=1 // pred_check_branch
      %27 = sbr.rel (0) target = $region9
    $region8: #{tpu_custom_call.1} parent=1 // pred_region
      %s29 = ssub.s32 256, 256
      %30 = vsyncadd [#allocation6], %s29
      %s31 = sshll.u32 [#allocation5], 4
      %s32 = int_to_ptr.vmem [resolvable:$true] %s31
      %37 = dma.hbm_to_vmem [thread:$0]  %s1, 256, %s32, [#allocation6], 64, 64, 4
    $region9: #{tpu_custom_call.1} parent=1 // pred_fallthru
      _
    // Predicated region
    $region10: #{tpu_custom_call.1} parent=1 // pred_check
      _
    $region11: #{tpu_custom_call.1} parent=1 // pred_check_branch
      %39 = sbr.rel (0) target = $region13
    $region12: #{tpu_custom_call.1} parent=1 // pred_region
      _
    $region13: #{tpu_custom_call.1} parent=1 // pred_fallthru
      _
    // Predicated region
    $region14: #{tpu_custom_call.1} parent=1 // pred_check
      _
    $region15: #{tpu_custom_call.1} parent=1 // pred_check_branch
      %41 = sbr.rel (0) target = $region17
    $region16: #{tpu_custom_call.1} parent=1 // pred_region
      %s43 = ssub.s32 256, 256
      %44 = vsyncadd [#allocation6], %s43
      %s45 = sshll.u32 [#allocation7], 4
      %s46 = int_to_ptr.vmem [resolvable:$true] %s45
      %51 = dma.hbm_to_vmem [thread:$0]  %s3, 256, %s46, [#allocation6], 64, 64, 4
    $region17: #{tpu_custom_call.1} parent=1 // pred_fallthru
      _
    // Predicated region
    $region18: #{tpu_custom_call.1} parent=1 // pred_check
      _
    $region19: #{tpu_custom_call.1} parent=1 // pred_check_branch
      %53 = sbr.rel (0) target = $region21
    $region20: #{tpu_custom_call.1} parent=1 // pred_region
      _
    $region21: #{tpu_custom_call.1} parent=1 // pred_fallthru
      _
    // Predicated region
    $region22: #{tpu_custom_call.1} parent=1 // pred_check
      _
    $region23: #{tpu_custom_call.1} parent=1 // pred_check_branch
      %55 = sbr.rel (0) target = $region25
    $region24: #{tpu_custom_call.1} parent=1 // pred_region
      %s57 = ssub.s32 256, 256
      %58 = vsyncadd [#allocation9], %s57
      %s59 = sshll.u32 [#allocation8], 4
      %s60 = int_to_ptr.vmem [resolvable:$true] %s59
      %65 = dma.hbm_to_vmem [thread:$0]  %s5, 256, %s60, [#allocation9], 64, 64, 4
    $region25: #{tpu_custom_call.1} parent=1 // pred_fallthru
      _
    // Predicated region
    $region26: #{tpu_custom_call.1} parent=1 // pred_check
      _
    $region27: #{tpu_custom_call.1} parent=1 // pred_check_branch
      %67 = sbr.rel (0) target = $region29
    $region28: #{tpu_custom_call.1} parent=1 // pred_region
      _
    $region29: #{tpu_custom_call.1} parent=1 // pred_fallthru
      _
    // Predicated region
    $region30: #{tpu_custom_call.1} parent=1 // pred_check
      _
    $region31: #{tpu_custom_call.1} parent=1 // pred_check_branch
      %69 = sbr.rel (0) target = $region33
    $region32: #{tpu_custom_call.1} parent=1 // pred_region
      %70 = dma.done [#allocation3], 128
    $region33: #{tpu_custom_call.1} parent=1 // pred_fallthru
      _
    // Predicated region
    $region34: #{tpu_custom_call.1} parent=1 // pred_check
      _
    $region35: #{tpu_custom_call.1} parent=1 // pred_check_branch
      %72 = sbr.rel (0) target = $region37
    $region36: #{tpu_custom_call.1} parent=1 // pred_region
      %73 = dma.done [#allocation6], 256
    $region37: #{tpu_custom_call.1} parent=1 // pred_fallthru
      _
    // Predicated region
    $region38: #{tpu_custom_call.1} parent=1 // pred_check
      _
    $region39: #{tpu_custom_call.1} parent=1 // pred_check_branch
      %75 = sbr.rel (0) target = $region41
    $region40: #{tpu_custom_call.1} parent=1 // pred_region
      %76 = dma.done [#allocation6], 256
    $region41: #{tpu_custom_call.1} parent=1 // pred_fallthru
      _
    // Predicated region
    $region42: #{tpu_custom_call.1} parent=1 // pred_check
      _
    $region43: #{tpu_custom_call.1} parent=1 // pred_check_branch
      %78 = sbr.rel (0) target = $region45
    $region44: #{tpu_custom_call.1} parent=1 // pred_region
      %79 = dma.done [#allocation9], 256
    $region45: #{tpu_custom_call.1} parent=1 // pred_fallthru
      _
    %v81 = vld [vmem:[#allocation2] sm:$0xff]
    %v82 = vpack.c.bf16 %v81, %v81
    %v83 = vld [vmem:[#allocation5] sm:$0xf]
    %v84 = vld [vmem:[#allocation5 + $0x4] sm:$0xf]
    %v85 = vld [vmem:[#allocation5 + $0x8] sm:$0xf]
    %v86 = vld [vmem:[#allocation5 + $0xc] sm:$0xf]
    %v87 = vld [vmem:[%s2] sm:$0x1]
    %v89 = vlaneseq
    %v90 = vshrl.u32 %v89, 7
    %v91 = vsub.s32 0, %v90
    %v92 = vrot.slane %v87, %v91
    %v98 = vunpack.c.l.b16 %v83
    %v99 = vunpack.c.l.b16 %v84
    %v100 = vunpack.c.l.b16 %v85
    %v101 = vunpack.c.l.b16 %v86
    %v102 = vpack.c.b16 %v99, %v98
    %v103 = vpack.c.b16 %v101, %v100
    %vm106 = vcmask 261120
    %v108 = vsel %vm106, %v82, 0
    %110 = vmatprep.subr.bf16.mxu0 0
    %111 = vmatpush1.bf16.msra.mxu0 0
    %112 = vmatprep.subr.bf16.mxu0 0
    %113 = vmatpush1.bf16.msra.mxu0 0
    %114 = vmatprep.subr.bf16.mxu0 0
    %115 = vmatpush1.bf16.msra.mxu0 0
    %116 = vmatprep.subr.bf16.mxu0 0
    %117 = vmatpush1.bf16.msra.mxu0 0
    %118 = vmatprep.subr.bf16.mxu0 0
    %119 = vmatpush1.bf16.msra.mxu0 0
    %120 = vmatprep.subr.bf16.mxu0 0
    %121 = vmatpush1.bf16.msra.mxu0 0
    %122 = vmatprep.subr.bf16.mxu0 0
    %123 = vmatpush1.bf16.msra.mxu0 %v103
    %124 = vmatprep.subr.bf16.mxu0 0
    %125 = vmatpush1.bf16.msra.mxu0 %v102
    %126 = vmatprep.subr.bf16.mxu0 0
    %127 = vmatpush2.bf16.msra.mxu0 0
    %128 = vmatprep.subr.bf16.mxu0 0
    %129 = vmatpush2.bf16.msra.mxu0 0
    %130 = vmatprep.subr.bf16.mxu0 0
    %131 = vmatpush2.bf16.msra.mxu0 0
    %132 = vmatprep.subr.bf16.mxu0 0
    %133 = vmatpush2.bf16.msra.mxu0 0
    %134 = vmatprep.subr.bf16.mxu0 0
    %135 = vmatpush2.bf16.msra.mxu0 0
    %136 = vmatprep.subr.bf16.mxu0 0
    %137 = vmatpush2.bf16.msra.mxu0 0
    %138 = vmatprep.subr.bf16.mxu0 0
    %139 = vmatpush2.bf16.msra.mxu0 0
    %140 = vmatprep.subr.bf16.mxu0 0
    %141 = vmatpush2.bf16.msra.mxu0 0
    %142 = vmatprep.mubr.bf16.mxu0 0
    %143 = vmatmul.mubr.bf16.gmra.mxu0 %v108
    %v144 = vpop.f32.mrf.mxu0
    %v145 = vadd.f32 %v92, %v144
    %v146 = vpop.f32.mrf.mxu0
    %v147 = vpop.f32.mrf.mxu0
    %v148 = vpop.f32.mrf.mxu0
    %149 = vdwg.mxu0
    %v150 = vmax.f32 %v145, 0.0
    %v151 = vpack.c.bf16 %v150, %v150
    %v152 = vld [vmem:[#allocation7] sm:$0xf]
    %v153 = vld [vmem:[#allocation7 + $0x4] sm:$0xf]
    %v154 = vld [vmem:[#allocation7 + $0x8] sm:$0xf]
    %v155 = vld [vmem:[#allocation7 + $0xc] sm:$0xf]
    %v156 = vld [vmem:[%s4] sm:$0x1]
    %v158 = vlaneseq
    %v159 = vshrl.u32 %v158, 7
    %v160 = vsub.s32 0, %v159
    %v161 = vrot.slane %v156, %v160
    %v167 = vunpack.c.l.b16 %v152
    %v168 = vunpack.c.l.b16 %v153
    %v169 = vunpack.c.l.b16 %v154
    %v170 = vunpack.c.l.b16 %v155
    %v171 = vpack.c.b16 %v168, %v167
    %v172 = vpack.c.b16 %v170, %v169
    %v176 = vsel %vm106, %v151, 0
    %178 = vmatprep.subr.bf16.mxu0 0
    %179 = vmatpush1.bf16.msra.mxu0 0
    %180 = vmatprep.subr.bf16.mxu0 0
    %181 = vmatpush1.bf16.msra.mxu0 0
    %182 = vmatprep.subr.bf16.mxu0 0
    %183 = vmatpush1.bf16.msra.mxu0 0
    %184 = vmatprep.subr.bf16.mxu0 0
    %185 = vmatpush1.bf16.msra.mxu0 0
    %186 = vmatprep.subr.bf16.mxu0 0
    %187 = vmatpush1.bf16.msra.mxu0 0
    %188 = vmatprep.subr.bf16.mxu0 0
    %189 = vmatpush1.bf16.msra.mxu0 0
    %190 = vmatprep.subr.bf16.mxu0 0
    %191 = vmatpush1.bf16.msra.mxu0 %v172
    %192 = vmatprep.subr.bf16.mxu0 0
    %193 = vmatpush1.bf16.msra.mxu0 %v171
    %194 = vmatprep.subr.bf16.mxu0 0
    %195 = vmatpush2.bf16.msra.mxu0 0
    %196 = vmatprep.subr.bf16.mxu0 0
    %197 = vmatpush2.bf16.msra.mxu0 0
    %198 = vmatprep.subr.bf16.mxu0 0
    %199 = vmatpush2.bf16.msra.mxu0 0
    %200 = vmatprep.subr.bf16.mxu0 0
    %201 = vmatpush2.bf16.msra.mxu0 0
    %202 = vmatprep.subr.bf16.mxu0 0
    %203 = vmatpush2.bf16.msra.mxu0 0
    %204 = vmatprep.subr.bf16.mxu0 0
    %205 = vmatpush2.bf16.msra.mxu0 0
    %206 = vmatprep.subr.bf16.mxu0 0
    %207 = vmatpush2.bf16.msra.mxu0 0
    %208 = vmatprep.subr.bf16.mxu0 0
    %209 = vmatpush2.bf16.msra.mxu0 0
    %210 = vmatprep.mubr.bf16.mxu0 0
    %211 = vmatmul.mubr.bf16.gmra.mxu0 %v176
    %v212 = vpop.f32.mrf.mxu0
    %v213 = vadd.f32 %v161, %v212
    %v214 = vpop.f32.mrf.mxu0
    %v215 = vpop.f32.mrf.mxu0
    %v216 = vpop.f32.mrf.mxu0
    %217 = vdwg.mxu0
    %v218 = vmax.f32 %v213, 0.0
    %v219 = vpack.c.bf16 %v218, %v218
    %v220 = vld [vmem:[#allocation8] sm:$0xf]
    %v221 = vld [vmem:[#allocation8 + $0x4] sm:$0xf]
    %v222 = vld [vmem:[#allocation8 + $0x8] sm:$0xf]
    %v223 = vld [vmem:[#allocation8 + $0xc] sm:$0xf]
    %v224 = vld [vmem:[%s6] sm:$0x1]
    %v226 = vlaneseq
    %v227 = vshrl.u32 %v226, 7
    %v228 = vsub.s32 0, %v227
    %v229 = vrot.slane %v224, %v228
    %v235 = vunpack.c.l.b16 %v220
    %v236 = vunpack.c.l.b16 %v221
    %v237 = vunpack.c.l.b16 %v222
    %v238 = vunpack.c.l.b16 %v223
    %v239 = vpack.c.b16 %v236, %v235
    %v240 = vpack.c.b16 %v238, %v237
    %v244 = vsel %vm106, %v219, 0
    %246 = vmatprep.subr.bf16.mxu0 0
    %247 = vmatpush1.bf16.msra.mxu0 0
    %248 = vmatprep.subr.bf16.mxu0 0
    %249 = vmatpush1.bf16.msra.mxu0 0
    %250 = vmatprep.subr.bf16.mxu0 0
    %251 = vmatpush1.bf16.msra.mxu0 0
    %252 = vmatprep.subr.bf16.mxu0 0
    %253 = vmatpush1.bf16.msra.mxu0 0
    %254 = vmatprep.subr.bf16.mxu0 0
    %255 = vmatpush1.bf16.msra.mxu0 0
    %256 = vmatprep.subr.bf16.mxu0 0
    %257 = vmatpush1.bf16.msra.mxu0 0
    %258 = vmatprep.subr.bf16.mxu0 0
    %259 = vmatpush1.bf16.msra.mxu0 %v240
    %260 = vmatprep.subr.bf16.mxu0 0
    %261 = vmatpush1.bf16.msra.mxu0 %v239
    %262 = vmatprep.subr.bf16.mxu0 0
    %263 = vmatpush2.bf16.msra.mxu0 0
    %264 = vmatprep.subr.bf16.mxu0 0
    %265 = vmatpush2.bf16.msra.mxu0 0
    %266 = vmatprep.subr.bf16.mxu0 0
    %267 = vmatpush2.bf16.msra.mxu0 0
    %268 = vmatprep.subr.bf16.mxu0 0
    %269 = vmatpush2.bf16.msra.mxu0 0
    %270 = vmatprep.subr.bf16.mxu0 0
    %271 = vmatpush2.bf16.msra.mxu0 0
    %272 = vmatprep.subr.bf16.mxu0 0
    %273 = vmatpush2.bf16.msra.mxu0 0
    %274 = vmatprep.subr.bf16.mxu0 0
    %275 = vmatpush2.bf16.msra.mxu0 0
    %276 = vmatprep.subr.bf16.mxu0 0
    %277 = vmatpush2.bf16.msra.mxu0 0
    %278 = vmatprep.mubr.bf16.mxu0 0
    %279 = vmatmul.mubr.bf16.gmra.mxu0 %v244
    %v280 = vpop.f32.mrf.mxu0
    %v281 = vadd.f32 %v229, %v280
    %v282 = vpop.f32.mrf.mxu0
    %v283 = vpop.f32.mrf.mxu0
    %v284 = vpop.f32.mrf.mxu0
    %285 = vdwg.mxu0
    %v286 = vlaneseq
    %v287 = vand.u32 %v286, 127
    %vm288 = vcmp.ge.s32.totalorder %v287, 4
    %vm289 = vcmp.lt.s32.totalorder %v287, 8
    %vm290 = vmand %vm288, %vm289
    %v291 = vtanh.pop %v281
    %v292 = vmul.f32 %v291, 6.0
    %v293 = vadd.f32 %v292, -4.0
    %v294 = vmul.f32 %v293, 1.442695
    %v295 = vpow.pop %v294
    %v296 = vsel %vm290, %v295, %v281
    %v297 = vpack.c.bf16 %v296, %v296
    %298 = vst [vmem:[#allocation10] sm:$0xf] %v297
    // Predicated region
    $region46: #{tpu_custom_call.1} parent=1 // pred_check
      _
    $region47: #{tpu_custom_call.1} parent=1 // pred_check_branch
      %300 = sbr.rel (0) target = $region49
    $region48: #{tpu_custom_call.1} parent=1 // pred_region
      %s302 = ssub.s32 64, 64
      %303 = vsyncadd [#allocation4], %s302
      %s305 = sshll.u32 [#allocation10], 4
      %s306 = int_to_ptr.vmem [resolvable:$true] %s305
      %308 = dma.vmem_to_hbm [thread:$0]  %s306, 64, %s7, [#allocation4]
    $region49: #{tpu_custom_call.1} parent=1 // pred_fallthru
      _
    // Predicated region
    $region50: #{tpu_custom_call.1} parent=1 // pred_check
      _
    $region51: #{tpu_custom_call.1} parent=1 // pred_check_branch
      %310 = sbr.rel (0) target = $region53
    $region52: #{tpu_custom_call.1} parent=1 // pred_region
      %311 = dma.done [#allocation4], 64
    $region53: #{tpu_custom_call.1} parent=1 // pred_fallthru
      _
    %312 = vsyncpa [#allocation3], 1
    %313 = vsyncpa [#allocation6], 1
    %314 = vsyncpa [#allocation9], 1
    %315 = vsyncpa [#allocation4], 1

// kernel: tpu_custom_call.1
$region0: #{tpu_custom_call.1}
  #allocation0 [shape = 'u32[]', space=smem, size = 0x4, offset = 0x4, fixed_abs, tag = 'smem constant byte address 0x4 - core index']
  #allocation1 [shape = 'u32[144,128]{1,0:T(1,128)}', space=vmem, size = 0x12000, scoped, tag = 'internal scratch']
  %s0 = inlined_call_operand.hbm [shape: f32[8,32], index: 0, kind: input, shape index: {}]
  %s1 = inlined_call_operand.hbm [shape: bf16[32,32], index: 1, kind: input, shape index: {}]
  %s2 = inlined_call_operand.vmem [shape: f32[1,32], index: 2, kind: input, shape index: {}]
  %s3 = inlined_call_operand.hbm [shape: bf16[32,32], index: 3, kind: input, shape index: {}]
  %s4 = inlined_call_operand.vmem [shape: f32[1,32], index: 4, kind: input, shape index: {}]
  %s5 = inlined_call_operand.hbm [shape: bf16[32,128], index: 5, kind: input, shape index: {}]
  %s6 = inlined_call_operand.vmem [shape: f32[1,128], index: 6, kind: input, shape index: {}]
  %s7 = inlined_call_operand.hbm [shape: bf16[8,128], index: 7, kind: output, shape index: {}]
  %s8 = sld [smem:[#allocation0]]
  $region54: #{tpu_custom_call.1} parent=0
    _
  %s10 = ssub.s32 1, %s8
  %s11 = scalar_select 0, %s10, %s8
  $region1: #{tpu_custom_call.1} parent=0
    #allocation2 [shape = 'u8[4096]{0}', space=vmem, size = 0x1000, scoped, tag = 'input window, operand 0, single buffered']
    #allocation3 [shape = 's32[1]{0}', space=sflag, size = 0x4, scoped, tag = 'scoped memory for tpu_custom_call.1']
    #allocation4 [shape = 's32[1]{0}', space=sflag, size = 0x4, scoped, tag = 'scoped memory for tpu_custom_call.1']
    #allocation5 [shape = 'u8[8192]{0}', space=vmem, size = 0x2000, scoped, tag = 'input window, operand 1, single buffered']
    #allocation6 [shape = 's32[1]{0}', space=sflag, size = 0x4, scoped, tag = 'scoped memory for tpu_custom_call.1']
    #allocation7 [shape = 'u8[8192]{0}', space=vmem, size = 0x2000, scoped, tag = 'input window, operand 3, single buffered']
    #allocation8 [shape = 'u8[8192]{0}', space=vmem, size = 0x2000, scoped, tag = 'input window, operand 5, single buffered']
    #allocation9 [shape = 's32[1]{0}', space=sflag, size = 0x4, scoped, tag = 'scoped memory for tpu_custom_call.1']
    #allocation10 [shape = 'u8[2048]{0}', space=vmem, size = 0x800, scoped, tag = 'output window, operand 0, single buffered']
    %12 = vsyncpa [#allocation3], 0
    %13 = vsyncpa [#allocation6], 0
    %14 = vsyncpa [#allocation9], 0
    %15 = vsyncpa [#allocation4], 0
    // Predicated region
    $region2: #{tpu_custom_call.1} parent=1 // pred_check
      _
    $region3: #{tpu_custom_call.1} parent=1 // pred_check_branch
      %17 = sbr.rel (0) target = $region5
    $region4: #{tpu_custom_call.1} parent=1 // pred_region
      %s19 = ssub.s32 128, 128
      %20 = vsyncadd [#allocation3], %s19
      %s22 = sshll.u32 [#allocation2], 4
      %s23 = int_to_ptr.vmem [resolvable:$true] %s22
      %25 = dma.hbm_to_vmem [thread:$0]  %s0, 128, %s23, [#allocation3]
    $region5: #{tpu_custom_call.1} parent=1 // pred_fallthru
      _
    // Predicated region
    $region6: #{tpu_custom_call.1} parent=1 // pred_check
      _
    $region7: #{tpu_custom_call.1} parent=1 // pred_check_branch
      %27 = sbr.rel (0) target = $region9
    $region8: #{tpu_custom_call.1} parent=1 // pred_region
      %s29 = ssub.s32 256, 256
      %30 = vsyncadd [#allocation6], %s29
      %s31 = sshll.u32 [#allocation5], 4
      %s32 = int_to_ptr.vmem [resolvable:$true] %s31
      %37 = dma.hbm_to_vmem [thread:$0]  %s1, 256, %s32, [#allocation6], 64, 64, 4
    $region9: #{tpu_custom_call.1} parent=1 // pred_fallthru
      _
    // Predicated region
    $region10: #{tpu_custom_call.1} parent=1 // pred_check
      _
    $region11: #{tpu_custom_call.1} parent=1 // pred_check_branch
      %39 = sbr.rel (0) target = $region13
    $region12: #{tpu_custom_call.1} parent=1 // pred_region
      _
    $region13: #{tpu_custom_call.1} parent=1 // pred_fallthru
      _
    // Predicated region
    $region14: #{tpu_custom_call.1} parent=1 // pred_check
      _
    $region15: #{tpu_custom_call.1} parent=1 // pred_check_branch
      %41 = sbr.rel (0) target = $region17
    $region16: #{tpu_custom_call.1} parent=1 // pred_region
      %s43 = ssub.s32 256, 256
      %44 = vsyncadd [#allocation6], %s43
      %s45 = sshll.u32 [#allocation7], 4
      %s46 = int_to_ptr.vmem [resolvable:$true] %s45
      %51 = dma.hbm_to_vmem [thread:$0]  %s3, 256, %s46, [#allocation6], 64, 64, 4
    $region17: #{tpu_custom_call.1} parent=1 // pred_fallthru
      _
    // Predicated region
    $region18: #{tpu_custom_call.1} parent=1 // pred_check
      _
    $region19: #{tpu_custom_call.1} parent=1 // pred_check_branch
      %53 = sbr.rel (0) target = $region21
    $region20: #{tpu_custom_call.1} parent=1 // pred_region
      _
    $region21: #{tpu_custom_call.1} parent=1 // pred_fallthru
      _
    // Predicated region
    $region22: #{tpu_custom_call.1} parent=1 // pred_check
      _
    $region23: #{tpu_custom_call.1} parent=1 // pred_check_branch
      %55 = sbr.rel (0) target = $region25
    $region24: #{tpu_custom_call.1} parent=1 // pred_region
      %s57 = ssub.s32 256, 256
      %58 = vsyncadd [#allocation9], %s57
      %s59 = sshll.u32 [#allocation8], 4
      %s60 = int_to_ptr.vmem [resolvable:$true] %s59
      %65 = dma.hbm_to_vmem [thread:$0]  %s5, 256, %s60, [#allocation9], 64, 64, 4
    $region25: #{tpu_custom_call.1} parent=1 // pred_fallthru
      _
    // Predicated region
    $region26: #{tpu_custom_call.1} parent=1 // pred_check
      _
    $region27: #{tpu_custom_call.1} parent=1 // pred_check_branch
      %67 = sbr.rel (0) target = $region29
    $region28: #{tpu_custom_call.1} parent=1 // pred_region
      _
    $region29: #{tpu_custom_call.1} parent=1 // pred_fallthru
      _
    // Predicated region
    $region30: #{tpu_custom_call.1} parent=1 // pred_check
      _
    $region31: #{tpu_custom_call.1} parent=1 // pred_check_branch
      %69 = sbr.rel (0) target = $region33
    $region32: #{tpu_custom_call.1} parent=1 // pred_region
      %70 = dma.done [#allocation3], 128
    $region33: #{tpu_custom_call.1} parent=1 // pred_fallthru
      _
    // Predicated region
    $region34: #{tpu_custom_call.1} parent=1 // pred_check
      _
    $region35: #{tpu_custom_call.1} parent=1 // pred_check_branch
      %72 = sbr.rel (0) target = $region37
    $region36: #{tpu_custom_call.1} parent=1 // pred_region
      %73 = dma.done [#allocation6], 256
    $region37: #{tpu_custom_call.1} parent=1 // pred_fallthru
      _
    // Predicated region
    $region38: #{tpu_custom_call.1} parent=1 // pred_check
      _
    $region39: #{tpu_custom_call.1} parent=1 // pred_check_branch
      %75 = sbr.rel (0) target = $region41
    $region40: #{tpu_custom_call.1} parent=1 // pred_region
      %76 = dma.done [#allocation6], 256
    $region41: #{tpu_custom_call.1} parent=1 // pred_fallthru
      _
    // Predicated region
    $region42: #{tpu_custom_call.1} parent=1 // pred_check
      _
    $region43: #{tpu_custom_call.1} parent=1 // pred_check_branch
      %78 = sbr.rel (0) target = $region45
    $region44: #{tpu_custom_call.1} parent=1 // pred_region
      %79 = dma.done [#allocation9], 256
    $region45: #{tpu_custom_call.1} parent=1 // pred_fallthru
      _
    %v81 = vld [vmem:[#allocation2] sm:$0xff]
    %v82 = vpack.c.bf16 %v81, %v81
    %v83 = vld [vmem:[#allocation5] sm:$0xf]
    %v84 = vld [vmem:[#allocation5 + $0x4] sm:$0xf]
    %v85 = vld [vmem:[#allocation5 + $0x8] sm:$0xf]
    %v86 = vld [vmem:[#allocation5 + $0xc] sm:$0xf]
    %v87 = vld [vmem:[%s2] sm:$0x1]
    %v89 = vlaneseq
    %v90 = vshrl.u32 %v89, 7
    %v91 = vsub.s32 0, %v90
    %v92 = vrot.slane %v87, %v91
    %v98 = vunpack.c.l.b16 %v83
    %v99 = vunpack.c.l.b16 %v84
    %v100 = vunpack.c.l.b16 %v85
    %v101 = vunpack.c.l.b16 %v86
    %v102 = vpack.c.b16 %v99, %v98
    %v103 = vpack.c.b16 %v101, %v100
    %vm106 = vcmask 261120
    %v108 = vsel %vm106, %v82, 0
    %110 = vmatprep.subr.bf16.mxu0 0
    %111 = vmatpush1.bf16.msra.mxu0 0
    %112 = vmatprep.subr.bf16.mxu0 0
    %113 = vmatpush1.bf16.msra.mxu0 0
    %114 = vmatprep.subr.bf16.mxu0 0
    %115 = vmatpush1.bf16.msra.mxu0 0
    %116 = vmatprep.subr.bf16.mxu0 0
    %117 = vmatpush1.bf16.msra.mxu0 0
    %118 = vmatprep.subr.bf16.mxu0 0
    %119 = vmatpush1.bf16.msra.mxu0 0
    %120 = vmatprep.subr.bf16.mxu0 0
    %121 = vmatpush1.bf16.msra.mxu0 0
    %122 = vmatprep.subr.bf16.mxu0 0
    %123 = vmatpush1.bf16.msra.mxu0 %v103
    %124 = vmatprep.subr.bf16.mxu0 0
    %125 = vmatpush1.bf16.msra.mxu0 %v102
    %126 = vmatprep.subr.bf16.mxu0 0
    %127 = vmatpush2.bf16.msra.mxu0 0
    %128 = vmatprep.subr.bf16.mxu0 0
    %129 = vmatpush2.bf16.msra.mxu0 0
    %130 = vmatprep.subr.bf16.mxu0 0
    %131 = vmatpush2.bf16.msra.mxu0 0
    %132 = vmatprep.subr.bf16.mxu0 0
    %133 = vmatpush2.bf16.msra.mxu0 0
    %134 = vmatprep.subr.bf16.mxu0 0
    %135 = vmatpush2.bf16.msra.mxu0 0
    %136 = vmatprep.subr.bf16.mxu0 0
    %137 = vmatpush2.bf16.msra.mxu0 0
    %138 = vmatprep.subr.bf16.mxu0 0
    %139 = vmatpush2.bf16.msra.mxu0 0
    %140 = vmatprep.subr.bf16.mxu0 0
    %141 = vmatpush2.bf16.msra.mxu0 0
    %142 = vmatprep.mubr.bf16.mxu0 0
    %143 = vmatmul.mubr.bf16.gmra.mxu0 %v108
    %v144 = vpop.f32.mrf.mxu0
    %v145 = vadd.f32 %v92, %v144
    %v146 = vpop.f32.mrf.mxu0
    %v147 = vpop.f32.mrf.mxu0
    %v148 = vpop.f32.mrf.mxu0
    %149 = vdwg.mxu0
    %v150 = vmax.f32 %v145, 0.0
    %v151 = vpack.c.bf16 %v150, %v150
    %v152 = vld [vmem:[#allocation7] sm:$0xf]
    %v153 = vld [vmem:[#allocation7 + $0x4] sm:$0xf]
    %v154 = vld [vmem:[#allocation7 + $0x8] sm:$0xf]
    %v155 = vld [vmem:[#allocation7 + $0xc] sm:$0xf]
    %v156 = vld [vmem:[%s4] sm:$0x1]
    %v158 = vlaneseq
    %v159 = vshrl.u32 %v158, 7
    %v160 = vsub.s32 0, %v159
    %v161 = vrot.slane %v156, %v160
    %v167 = vunpack.c.l.b16 %v152
    %v168 = vunpack.c.l.b16 %v153
    %v169 = vunpack.c.l.b16 %v154
    %v170 = vunpack.c.l.b16 %v155
    %v171 = vpack.c.b16 %v168, %v167
    %v172 = vpack.c.b16 %v170, %v169
    %v176 = vsel %vm106, %v151, 0
    %178 = vmatprep.subr.bf16.mxu0 0
    %179 = vmatpush1.bf16.msra.mxu0 0
    %180 = vmatprep.subr.bf16.mxu0 0
    %181 = vmatpush1.bf16.msra.mxu0 0
    %182 = vmatprep.subr.bf16.mxu0 0
    %183 = vmatpush1.bf16.msra.mxu0 0
    %184 = vmatprep.subr.bf16.mxu0 0
    %185 = vmatpush1.bf16.msra.mxu0 0
    %186 = vmatprep.subr.bf16.mxu0 0
    %187 = vmatpush1.bf16.msra.mxu0 0
    %188 = vmatprep.subr.bf16.mxu0 0
    %189 = vmatpush1.bf16.msra.mxu0 0
    %190 = vmatprep.subr.bf16.mxu0 0
    %191 = vmatpush1.bf16.msra.mxu0 %v172
    %192 = vmatprep.subr.bf16.mxu0 0
    %193 = vmatpush1.bf16.msra.mxu0 %v171
    %194 = vmatprep.subr.bf16.mxu0 0
    %195 = vmatpush2.bf16.msra.mxu0 0
    %196 = vmatprep.subr.bf16.mxu0 0
    %197 = vmatpush2.bf16.msra.mxu0 0
    %198 = vmatprep.subr.bf16.mxu0 0
    %199 = vmatpush2.bf16.msra.mxu0 0
    %200 = vmatprep.subr.bf16.mxu0 0
    %201 = vmatpush2.bf16.msra.mxu0 0
    %202 = vmatprep.subr.bf16.mxu0 0
    %203 = vmatpush2.bf16.msra.mxu0 0
    %204 = vmatprep.subr.bf16.mxu0 0
    %205 = vmatpush2.bf16.msra.mxu0 0
    %206 = vmatprep.subr.bf16.mxu0 0
    %207 = vmatpush2.bf16.msra.mxu0 0
    %208 = vmatprep.subr.bf16.mxu0 0
    %209 = vmatpush2.bf16.msra.mxu0 0
    %210 = vmatprep.mubr.bf16.mxu0 0
    %211 = vmatmul.mubr.bf16.gmra.mxu0 %v176
    %v212 = vpop.f32.mrf.mxu0
    %v213 = vadd.f32 %v161, %v212
    %v214 = vpop.f32.mrf.mxu0
    %v215 = vpop.f32.mrf.mxu0
    %v216 = vpop.f32.mrf.mxu0
    %217 = vdwg.mxu0
    %v218 = vmax.f32 %v213, 0.0
    %v219 = vpack.c.bf16 %v218, %v218
    %v220 = vld [vmem:[#allocation8] sm:$0xf]
    %v221 = vld [vmem:[#allocation8 + $0x4] sm:$0xf]
    %v222 = vld [vmem:[#allocation8 + $0x8] sm:$0xf]
    %v223 = vld [vmem:[#allocation8 + $0xc] sm:$0xf]
    %v224 = vld [vmem:[%s6] sm:$0x1]
    %v226 = vlaneseq
    %v227 = vshrl.u32 %v226, 7
    %v228 = vsub.s32 0, %v227
    %v229 = vrot.slane %v224, %v228
    %v235 = vunpack.c.l.b16 %v220
    %v236 = vunpack.c.l.b16 %v221
    %v237 = vunpack.c.l.b16 %v222
    %v238 = vunpack.c.l.b16 %v223
    %v239 = vpack.c.b16 %v236, %v235
    %v240 = vpack.c.b16 %v238, %v237
    %v244 = vsel %vm106, %v219, 0
    %246 = vmatprep.subr.bf16.mxu0 0
    %247 = vmatpush1.bf16.msra.mxu0 0
    %248 = vmatprep.subr.bf16.mxu0 0
    %249 = vmatpush1.bf16.msra.mxu0 0
    %250 = vmatprep.subr.bf16.mxu0 0
    %251 = vmatpush1.bf16.msra.mxu0 0
    %252 = vmatprep.subr.bf16.mxu0 0
    %253 = vmatpush1.bf16.msra.mxu0 0
    %254 = vmatprep.subr.bf16.mxu0 0
    %255 = vmatpush1.bf16.msra.mxu0 0
    %256 = vmatprep.subr.bf16.mxu0 0
    %257 = vmatpush1.bf16.msra.mxu0 0
    %258 = vmatprep.subr.bf16.mxu0 0
    %259 = vmatpush1.bf16.msra.mxu0 %v240
    %260 = vmatprep.subr.bf16.mxu0 0
    %261 = vmatpush1.bf16.msra.mxu0 %v239
    %262 = vmatprep.subr.bf16.mxu0 0
    %263 = vmatpush2.bf16.msra.mxu0 0
    %264 = vmatprep.subr.bf16.mxu0 0
    %265 = vmatpush2.bf16.msra.mxu0 0
    %266 = vmatprep.subr.bf16.mxu0 0
    %267 = vmatpush2.bf16.msra.mxu0 0
    %268 = vmatprep.subr.bf16.mxu0 0
    %269 = vmatpush2.bf16.msra.mxu0 0
    %270 = vmatprep.subr.bf16.mxu0 0
    %271 = vmatpush2.bf16.msra.mxu0 0
    %272 = vmatprep.subr.bf16.mxu0 0
    %273 = vmatpush2.bf16.msra.mxu0 0
    %274 = vmatprep.subr.bf16.mxu0 0
    %275 = vmatpush2.bf16.msra.mxu0 0
    %276 = vmatprep.subr.bf16.mxu0 0
    %277 = vmatpush2.bf16.msra.mxu0 0
    %278 = vmatprep.mubr.bf16.mxu0 0
    %279 = vmatmul.mubr.bf16.gmra.mxu0 %v244
    %v280 = vpop.f32.mrf.mxu0
    %v281 = vadd.f32 %v229, %v280
    %v282 = vpop.f32.mrf.mxu0
    %v283 = vpop.f32.mrf.mxu0
    %v284 = vpop.f32.mrf.mxu0
    %285 = vdwg.mxu0
    %v286 = vlaneseq
    %v287 = vand.u32 %v286, 127
    %vm288 = vcmp.ge.s32.totalorder %v287, 4
    %vm289 = vcmp.lt.s32.totalorder %v287, 8
    %vm290 = vmand %vm288, %vm289
    %v291 = vtanh.pop %v281
    %v292 = vmul.f32 %v291, 6.0
    %v293 = vadd.f32 %v292, -4.0
    %v294 = vmul.f32 %v293, 1.442695
    %v295 = vpow.pop %v294
    %v296 = vsel %vm290, %v295, %v281
    %v297 = vpack.c.bf16 %v296, %v296
    %298 = vst [vmem:[#allocation10] sm:$0xf] %v297
    // Predicated region
    $region46: #{tpu_custom_call.1} parent=1 // pred_check
      _
    $region47: #{tpu_custom_call.1} parent=1 // pred_check_branch
      %300 = sbr.rel (0) target = $region49
    $region48: #{tpu_custom_call.1} parent=1 // pred_region
      %s302 = ssub.s32 64, 64
      %303 = vsyncadd [#allocation4], %s302
      %s305 = sshll.u32 [#allocation10], 4
      %s306 = int_to_ptr.vmem [resolvable:$true] %s305
      %308 = dma.vmem_to_hbm [thread:$0]  %s306, 64, %s7, [#allocation4]
    $region49: #{tpu_custom_call.1} parent=1 // pred_fallthru
      _
    // Predicated region
    $region50: #{tpu_custom_call.1} parent=1 // pred_check
      _
    $region51: #{tpu_custom_call.1} parent=1 // pred_check_branch
      %310 = sbr.rel (0) target = $region53
    $region52: #{tpu_custom_call.1} parent=1 // pred_region
      %311 = dma.done [#allocation4], 64
    $region53: #{tpu_custom_call.1} parent=1 // pred_fallthru
      _
    %312 = vsyncpa [#allocation3], 1
    %313 = vsyncpa [#allocation6], 1
    %314 = vsyncpa [#allocation9], 1
    %315 = vsyncpa [#allocation4], 1

</llo_original>
